<compile_context>
chip_gen: v6e
topology: v6e:2x2x1
jax: 0.10.0
libtpu: 0.0.40
codegen_flags: <defaults>
</compile_context>

<pallas_src>
import jax
import jax.numpy as jnp
from jax import lax
from jax.experimental import pallas as pl
from jax.experimental.pallas import tpu as pltpu


def _round_up(x: int, m: int) -> int:
    return ((x + m - 1) // m) * m


def rnn_fc_kernel(xp_ref, whh_ref, wfc_ref, bfc_ref, out_ref, h_ref):
    """One (batch-tile, seq-chunk) grid step of the tanh RNN + final Linear.

    xp_ref : (T, TB, H)  pre-projected inputs: (E[text] @ W_ih^T + b), zero-padded
    whh_ref: (H, H)      W_hh^T (zero-padded)
    wfc_ref: (H, O)      W_fc^T (zero-padded)
    bfc_ref: (1, O)      b_fc   (zero-padded)
    out_ref: (TB, O)     final logits for this batch tile (lane-dense)
    h_ref  : (TB, H)     hidden-state carry scratch (VMEM), persists across seq chunks
    """
    t = pl.program_id(1)  # seq-chunk index (inner, "arbitrary" axis)

    @pl.when(t == 0)
    def _init():
        h_ref[...] = jnp.zeros_like(h_ref)

    whh = whh_ref[...]
    n_steps = xp_ref.shape[0]

    def step(i, h):
        # Input projection + bias were hoisted out of the recurrence, so the
        # serial per-timestep chain is a single MXU matmul + EUP tanh.
        pre = xp_ref[i] + jnp.dot(h, whh, preferred_element_type=jnp.float32)
        return jnp.tanh(pre)

    h = lax.fori_loop(0, n_steps, step, h_ref[...], unroll=True)
    h_ref[...] = h

    @pl.when(t == pl.num_programs(1) - 1)
    def _finalize():
        out = jnp.dot(h, wfc_ref[...], preferred_element_type=jnp.float32) + bfc_ref[...]
        out_ref[...] = out.astype(out_ref.dtype)


def rnn_forward(text, params, *, seq_chunk=4, batch_tile=8):
    """text: (seq_len, batch) int32 token ids. Returns (batch, output_dim) float32."""
    emb = params["embedding"]          # (vocab, emb_dim)
    w_ih_t = params["w_ih_t"]          # (emb_dim, hidden)
    w_hh_t = params["w_hh_t"]          # (hidden, hidden)
    b_comb = params["b_comb"]          # (1, hidden) = b_ih + b_hh
    w_fc_t = params["w_fc_t"]          # (hidden, out_dim)
    b_fc = params["b_fc"]              # (1, out_dim)

    seq, batch = text.shape
    hidden = w_hh_t.shape[0]
    out_dim = w_fc_t.shape[1]

    # Padded, TPU-friendly sizes: sublane multiple of 8, lane multiple of 128.
    H = _round_up(hidden, 128)         # lane-dense hidden
    O = _round_up(out_dim, 128)        # lane-dense output -> unmasked stores
    B = _round_up(batch, batch_tile)   # sublane-aligned batch
    S = _round_up(seq, seq_chunk)      # sequence rounded up to chunk multiple

    # Fold embedding gather + input projection + bias together (exact: row
    # gather commutes with the matmul):  x_proj[t, b] = (E @ W_ih^T + b)[text[t, b]].
    proj = emb @ w_ih_t + b_comb                              # (vocab, hidden)
    proj = jnp.pad(proj, ((0, 0), (0, H - hidden)))           # zero-pad lanes
    text_p = jnp.pad(text, ((0, 0), (0, B - batch)))          # pad batch with token 0
    x_proj = proj[text_p]                                     # (seq, B, H)
    # Front-pad the sequence with zero inputs: tanh(0 @ Whh + 0) = 0, so the
    # hidden state stays exactly 0 through the padded prefix -> semantics kept.
    x_proj = jnp.pad(x_proj, ((S - seq, 0), (0, 0), (0, 0)))

    # Zero-padded weights: padded hidden lanes stay exactly 0 through tanh.
    whh_p = jnp.pad(w_hh_t, ((0, H - hidden), (0, H - hidden)))
    wfc_p = jnp.pad(w_fc_t, ((0, H - hidden), (0, O - out_dim)))
    bfc_p = jnp.pad(b_fc, ((0, 0), (0, O - out_dim)))

    nb = B // batch_tile
    nt = S // seq_chunk

    cost = pl.CostEstimate(
        flops=2 * S * B * H * H + 2 * B * H * O,
        transcendentals=S * B * H,
        bytes_accessed=4 * (S * B * H + H * H + H * O + O + B * O),
    )

    out_padded = pl.pallas_call(
        rnn_fc_kernel,
        out_shape=jax.ShapeDtypeStruct((B, O), jnp.float32),
        grid_spec=pltpu.PrefetchScalarGridSpec(
            num_scalar_prefetch=0,
            grid=(nb, nt),  # (batch tiles [parallel], seq chunks [arbitrary])
            in_specs=[
                pl.BlockSpec((seq_chunk, batch_tile, H), lambda b, t: (t, b, 0)),
                pl.BlockSpec((H, H), lambda b, t: (0, 0)),
                pl.BlockSpec((H, O), lambda b, t: (0, 0)),
                pl.BlockSpec((1, O), lambda b, t: (0, 0)),
            ],
            out_specs=pl.BlockSpec((batch_tile, O), lambda b, t: (b, 0)),
            scratch_shapes=[pltpu.VMEM((batch_tile, H), jnp.float32)],
        ),
        compiler_params=pltpu.CompilerParams(
            dimension_semantics=("parallel", "arbitrary"),
            vmem_limit_bytes=32 * 1024 * 1024,
        ),
        cost_estimate=cost,
    )(x_proj, whh_p, wfc_p, bfc_p)

    return out_padded[:batch, :out_dim]


def make_params(key, input_dim, embedding_dim, hidden_dim, output_dim):
    ks = jax.random.split(key, 7)
    scale = 0.1
    return {
        "embedding": scale * jax.random.normal(ks[0], (input_dim, embedding_dim), jnp.float32),
        "w_ih_t": scale * jax.random.normal(ks[1], (embedding_dim, hidden_dim), jnp.float32),
        "w_hh_t": scale * jax.random.normal(ks[2], (hidden_dim, hidden_dim), jnp.float32),
        "b_comb": (scale * jax.random.normal(ks[3], (1, hidden_dim), jnp.float32)
                   + scale * jax.random.normal(ks[4], (1, hidden_dim), jnp.float32)),
        "w_fc_t": scale * jax.random.normal(ks[5], (hidden_dim, output_dim), jnp.float32),
        "b_fc": scale * jax.random.normal(ks[6], (1, output_dim), jnp.float32),
    }


def reference_forward(text, params):
    """Pure-JAX reference replicating PyTorch tanh-RNN semantics."""
    embedded = params["embedding"][text]     # (seq, batch, emb)
    seq = embedded.shape[0]
    batch = embedded.shape[1]
    hidden = params["w_hh_t"].shape[0]
    h = jnp.zeros((batch, hidden), jnp.float32)
    for t in range(seq):
        h = jnp.tanh(embedded[t] @ params["w_ih_t"] + h @ params["w_hh_t"] + params["b_comb"])
    return h @ params["w_fc_t"] + params["b_fc"]


if __name__ == "__main__":
    # Small shapes consistent with the module.
    input_dim = 50        # vocab size
    embedding_dim = 32
    hidden_dim = 32
    output_dim = 2
    seq_len = 8
    batch = 2

    key = jax.random.PRNGKey(0)
    k_param, k_text = jax.random.split(key)
    params = make_params(k_param, input_dim, embedding_dim, hidden_dim, output_dim)
    text = jax.random.randint(k_text, (seq_len, batch), 0, input_dim, dtype=jnp.int32)

    out = jax.block_until_ready(rnn_forward(text, params))
    ref = reference_forward(text, params)

    assert out.shape == (batch, output_dim)
    assert jnp.allclose(out, ref, atol=2e-5, rtol=2e-5), (out, ref)
    print("KERNEL_OK")
</pallas_src>

<mosaic_0001>
module attributes {stable_mosaic.version = 11 : i64} {
  func.func @rnn_fc_kernel(%arg0: i32, %arg1: i32, %arg2: memref<4x8x128xf32, #tpu.memory_space<vmem>>, %arg3: memref<128x128xf32, #tpu.memory_space<vmem>>, %arg4: memref<128x128xf32, #tpu.memory_space<vmem>>, %arg5: memref<1x128xf32, #tpu.memory_space<vmem>>, %arg6: memref<8x128xf32, #tpu.memory_space<vmem>>, %arg7: memref<8x128xf32, #tpu.memory_space<vmem>>) attributes {dimension_semantics = [#tpu.dimension_semantics<parallel>, #tpu.dimension_semantics<arbitrary>], iteration_bounds = array<i64: 1, 2>, scalar_prefetch = 0 : i64, scratch_operands = 1 : i64, tpu.core_type = #tpu.core_type<tc>, window_params = [{transform_indices = @transform_0, window_bounds = array<i64: 4, 8, 128>}, {pipeline_mode = #tpu.pipeline_mode<synchronous>, transform_indices = @transform_1, window_bounds = array<i64: 128, 128>}, {pipeline_mode = #tpu.pipeline_mode<synchronous>, transform_indices = @transform_2, window_bounds = array<i64: 128, 128>}, {pipeline_mode = #tpu.pipeline_mode<synchronous>, transform_indices = @transform_3, window_bounds = array<i64: 1, 128>}, {transform_indices = @transform_4, window_bounds = array<i64: 8, 128>}]} {
    %c0_i32 = arith.constant 0 : i32
    %0 = arith.cmpi eq, %arg1, %c0_i32 : i32
    %1 = arith.extui %0 : i1 to i32
    %c0_i32_0 = arith.constant 0 : i32
    %2 = arith.cmpi ne, %1, %c0_i32_0 : i32
    scf.if %2 {
      %cst_20 = arith.constant 0.000000e+00 : f32
      %33 = vector.broadcast %cst_20 : f32 to vector<8x128xf32>
      %c0_21 = arith.constant 0 : index
      %c0_22 = arith.constant 0 : index
      %34 = vector.load %arg7[%c0_21, %c0_22] : memref<8x128xf32, #tpu.memory_space<vmem>>, vector<8x128xf32>
      tpu.vector_store %arg7[%c0_21, %c0_22], %33 {strides = array<i32>} : memref<8x128xf32, #tpu.memory_space<vmem>>, vector<8x128xf32>,
    } else {
    }
    %c0 = arith.constant 0 : index
    %c0_1 = arith.constant 0 : index
    %3 = vector.load %arg3[%c0, %c0_1] : memref<128x128xf32, #tpu.memory_space<vmem>>, vector<128x128xf32>
    %c0_2 = arith.constant 0 : index
    %c0_3 = arith.constant 0 : index
    %4 = vector.load %arg7[%c0_2, %c0_3] : memref<8x128xf32, #tpu.memory_space<vmem>>, vector<8x128xf32>
    %c0_i32_4 = arith.constant 0 : i32
    %5 = arith.index_cast %c0_i32_4 : i32 to index
    %c0_5 = arith.constant 0 : index
    %c0_6 = arith.constant 0 : index
    %6 = vector.load %arg2[%5, %c0_5, %c0_6] : memref<4x8x128xf32, #tpu.memory_space<vmem>>, vector<1x8x128xf32>
    %7 = vector.shape_cast %6 : vector<1x8x128xf32> to vector<8x128xf32>
    %cst = arith.constant dense<0.000000e+00> : vector<8x128xf32>
    %8 = tpu.matmul %4, %3, %cst {dimension_numbers = #tpu.dot_dimension_numbers<[1], [0], [0], [1], [0, 0, 1, 1], [], []>} : vector<8x128xf32>, vector<128x128xf32>, vector<8x128xf32> -> vector<8x128xf32>
    %9 = arith.addf %7, %8 : vector<8x128xf32>
    %10 = math.tanh %9 : vector<8x128xf32>
    %c1_i32 = arith.constant 1 : i32
    %11 = arith.index_cast %c1_i32 : i32 to index
    %c0_7 = arith.constant 0 : index
    %c0_8 = arith.constant 0 : index
    %12 = vector.load %arg2[%11, %c0_7, %c0_8] : memref<4x8x128xf32, #tpu.memory_space<vmem>>, vector<1x8x128xf32>
    %13 = vector.shape_cast %12 : vector<1x8x128xf32> to vector<8x128xf32>
    %cst_9 = arith.constant dense<0.000000e+00> : vector<8x128xf32>
    %14 = tpu.matmul %10, %3, %cst_9 {dimension_numbers = #tpu.dot_dimension_numbers<[1], [0], [0], [1], [0, 0, 1, 1], [], []>} : vector<8x128xf32>, vector<128x128xf32>, vector<8x128xf32> -> vector<8x128xf32>
    %15 = arith.addf %13, %14 : vector<8x128xf32>
    %16 = math.tanh %15 : vector<8x128xf32>
    %c2_i32 = arith.constant 2 : i32
    %17 = arith.index_cast %c2_i32 : i32 to index
    %c0_10 = arith.constant 0 : index
    %c0_11 = arith.constant 0 : index
    %18 = vector.load %arg2[%17, %c0_10, %c0_11] : memref<4x8x128xf32, #tpu.memory_space<vmem>>, vector<1x8x128xf32>
    %19 = vector.shape_cast %18 : vector<1x8x128xf32> to vector<8x128xf32>
    %cst_12 = arith.constant dense<0.000000e+00> : vector<8x128xf32>
    %20 = tpu.matmul %16, %3, %cst_12 {dimension_numbers = #tpu.dot_dimension_numbers<[1], [0], [0], [1], [0, 0, 1, 1], [], []>} : vector<8x128xf32>, vector<128x128xf32>, vector<8x128xf32> -> vector<8x128xf32>
    %21 = arith.addf %19, %20 : vector<8x128xf32>
    %22 = math.tanh %21 : vector<8x128xf32>
    %c3_i32 = arith.constant 3 : i32
    %23 = arith.index_cast %c3_i32 : i32 to index
    %c0_13 = arith.constant 0 : index
    %c0_14 = arith.constant 0 : index
    %24 = vector.load %arg2[%23, %c0_13, %c0_14] : memref<4x8x128xf32, #tpu.memory_space<vmem>>, vector<1x8x128xf32>
    %25 = vector.shape_cast %24 : vector<1x8x128xf32> to vector<8x128xf32>
    %cst_15 = arith.constant dense<0.000000e+00> : vector<8x128xf32>
    %26 = tpu.matmul %22, %3, %cst_15 {dimension_numbers = #tpu.dot_dimension_numbers<[1], [0], [0], [1], [0, 0, 1, 1], [], []>} : vector<8x128xf32>, vector<128x128xf32>, vector<8x128xf32> -> vector<8x128xf32>
    %27 = arith.addf %25, %26 : vector<8x128xf32>
    %28 = math.tanh %27 : vector<8x128xf32>
    %c4_i32 = arith.constant 4 : i32
    %c0_16 = arith.constant 0 : index
    %c0_17 = arith.constant 0 : index
    %29 = vector.load %arg7[%c0_16, %c0_17] : memref<8x128xf32, #tpu.memory_space<vmem>>, vector<8x128xf32>
    tpu.vector_store %arg7[%c0_16, %c0_17], %28 {strides = array<i32>} : memref<8x128xf32, #tpu.memory_space<vmem>>, vector<8x128xf32>,
    %c1_i32_18 = arith.constant 1 : i32
    %30 = arith.cmpi eq, %arg1, %c1_i32_18 : i32
    %31 = arith.extui %30 : i1 to i32
    %c0_i32_19 = arith.constant 0 : i32
    %32 = arith.cmpi ne, %31, %c0_i32_19 : i32
    scf.if %32 {
      %c0_20 = arith.constant 0 : index
      %c0_21 = arith.constant 0 : index
      %33 = vector.load %arg4[%c0_20, %c0_21] : memref<128x128xf32, #tpu.memory_space<vmem>>, vector<128x128xf32>
      %cst_22 = arith.constant dense<0.000000e+00> : vector<8x128xf32>
      %34 = tpu.matmul %28, %33, %cst_22 {dimension_numbers = #tpu.dot_dimension_numbers<[1], [0], [0], [1], [0, 0, 1, 1], [], []>} : vector<8x128xf32>, vector<128x128xf32>, vector<8x128xf32> -> vector<8x128xf32>
      %c0_23 = arith.constant 0 : index
      %c0_24 = arith.constant 0 : index
      %35 = vector.load %arg5[%c0_23, %c0_24] : memref<1x128xf32, #tpu.memory_space<vmem>>, vector<1x128xf32>
      %36 = vector.broadcast %35 : vector<1x128xf32> to vector<8x128xf32>
      %37 = arith.addf %34, %36 : vector<8x128xf32>
      %c0_25 = arith.constant 0 : index
      %c0_26 = arith.constant 0 : index
      %38 = vector.load %arg6[%c0_25, %c0_26] : memref<8x128xf32, #tpu.memory_space<vmem>>, vector<8x128xf32>
      tpu.vector_store %arg6[%c0_25, %c0_26], %37 {strides = array<i32>} : memref<8x128xf32, #tpu.memory_space<vmem>>, vector<8x128xf32>,
    } else {
    }
    return
  }
  func.func @transform_0(%arg0: i32, %arg1: i32) -> (i32, i32, i32) {
    %c0_i32 = arith.constant 0 : i32
    %c0_i32_0 = arith.constant 0 : i32
    return %arg1, %arg0, %c0_i32 : i32, i32, i32
  }
  func.func @transform_1(%arg0: i32, %arg1: i32) -> (i32, i32) {
    %c0_i32 = arith.constant 0 : i32
    %c0_i32_0 = arith.constant 0 : i32
    %c0_i32_1 = arith.constant 0 : i32
    return %c0_i32, %c0_i32_0 : i32, i32
  }
  func.func @transform_2(%arg0: i32, %arg1: i32) -> (i32, i32) {
    %c0_i32 = arith.constant 0 : i32
    %c0_i32_0 = arith.constant 0 : i32
    %c0_i32_1 = arith.constant 0 : i32
    return %c0_i32, %c0_i32_0 : i32, i32
  }
  func.func @transform_3(%arg0: i32, %arg1: i32) -> (i32, i32) {
    %c0_i32 = arith.constant 0 : i32
    %c0_i32_0 = arith.constant 0 : i32
    %c0_i32_1 = arith.constant 0 : i32
    return %c0_i32, %c0_i32_0 : i32, i32
  }
  func.func @transform_4(%arg0: i32, %arg1: i32) -> (i32, i32) {
    %c0_i32 = arith.constant 0 : i32
    %c0_i32_0 = arith.constant 0 : i32
    return %arg0, %c0_i32 : i32, i32
  }
}

</mosaic_0001>

<llo_original>
// kernel: tpu_custom_call.1
$region0: #{tpu_custom_call.1}
  #allocation0 [shape = 'u32[]', space=smem, size = 0x4, offset = 0x4, fixed_abs, tag = 'smem constant byte address 0x4 - core index']
  #allocation1 [shape = 'u32[144,128]{1,0:T(1,128)}', space=vmem, size = 0x12000, scoped, tag = 'internal scratch']
  #allocation2 [shape = 'f32[8,128]{1,0:T(8,128)}', space=vmem, size = 0x1000, scoped, tag = 'scratch operand']
  %s0 = inlined_call_operand.hbm [shape: f32[8,8,128], index: 0, kind: input, shape index: {}]
  %s1 = inlined_call_operand.hbm [shape: f32[128,128], index: 1, kind: input, shape index: {}]
  %s2 = inlined_call_operand.hbm [shape: f32[128,128], index: 2, kind: input, shape index: {}]
  %s3 = inlined_call_operand.vmem [shape: f32[1,128], index: 3, kind: input, shape index: {}]
  %s4 = inlined_call_operand.hbm [shape: f32[8,128], index: 4, kind: output, shape index: {}]
  %s5 = sld [smem:[#allocation0]]
  $region69: #{tpu_custom_call.1} parent=0
    _
  %s7 = ssub.s32 1, %s5
  %s8 = scalar_select 0, %s7, %s5
  $region1: #{tpu_custom_call.1} parent=0
    #allocation3 [shape = 'u8[32768]{0}', space=vmem, size = 0x8000, scoped, tag = 'input window, operand 0']
    #allocation4 [shape = 's32[2]{0}', space=sflag, size = 0x8, scoped, tag = 'scoped memory for tpu_custom_call.1']
    #allocation5 [shape = 's32[2]{0}', space=sflag, size = 0x8, scoped, tag = 'scoped memory for tpu_custom_call.1']
    #allocation6 [shape = 'u8[65536]{0}', space=vmem, size = 0x10000, scoped, tag = 'input window, operand 1, single buffered']
    #allocation7 [shape = 's32[1]{0}', space=sflag, size = 0x4, scoped, tag = 'scoped memory for tpu_custom_call.1']
    #allocation8 [shape = 'u8[65536]{0}', space=vmem, size = 0x10000, scoped, tag = 'input window, operand 2, single buffered']
    #allocation9 [shape = 'u8[4096]{0}', space=vmem, size = 0x1000, scoped, tag = 'output window, operand 0, single buffered']
    %9 = vsyncpa [#allocation4], 0
    %s10 = scalar_lea.sflag [#allocation4], 1
    %11 = vsyncpa %s10, 0
    %12 = vsyncpa [#allocation7], 0
    %13 = vsyncpa [#allocation5], 0
    loop: start=0, step=1, limit=4
    $region2: #{tpu_custom_call.1} parent=1 // loop_pre_header
      _
    $region3: #{tpu_custom_call.1} parent=1 // loop_header
      %s15 = sphi 0, %s19
      %p16 = scmp.ge.s32.totalorder %s15, 4
      %s22 = sphi 0, %s34
      %s23 = sphi 0, %s30
      %s24 = sphi 0, %s22
      %s25 = sphi 0, %s23
      %s26 = sphi 0, %s24
      %s27 = sphi 0, %s25
      %s39 = sphi 0, %s41
      %s42 = sphi 0, %s39
      %s43 = sphi 0, %s42
      %s59 = sphi 0, %s43
      %s63 = sphi 0, %s63
      %s65 = sphi 0, %s63
      %s66 = sphi 0, %s65
      %s80 = sphi 0, %s66
      %s84 = sphi 0, %s84
      %s86 = sphi 0, %s84
      %s87 = sphi 0, %s86
      %s101 = sphi 0, %s87
      %s105 = sphi 0, %s105
      %s107 = sphi 0, %s105
      %s108 = sphi 0, %s107
      %s122 = sphi 0, %s108
      %s128 = sphi 0, %s130
      %s131 = sphi 0, %s128
      %s132 = sphi 0, %s131
      %s148 = sphi 0, %s132
    $region4: #{tpu_custom_call.1} parent=1 // loop_header_branch
      %18 = sbr.rel (%p16) target = $region8
    $region5: #{tpu_custom_call.1} parent=1 // loop_body
      %s20 = ssub.s32 %s15, 1
      %s21 = ssub.s32 %s15, 2
      %s28 = sadd.s32 1, %s23
      %p29 = scmp.ge.s32.totalorder %s28, 2
      %s30 = scalar_select %p29, 0, %s28
      %s31 = sadd.s32 1, %s22
      %s32 = scalar_select %p29, %s31, %s22
      %p33 = scmp.ge.s32.totalorder %s32, 1
      %s34 = scalar_select %p33, 0, %s32
      %s35 = ssub.s32 %s23, %s30
      %s36 = ssub.s32 %s22, %s34
      %s37 = sor.u32 %s35, %s36
      %p38 = scmp.eq.s32.totalorder %s37, 0
      %s40 = sadd.s32 %s39, 1
      %s41 = scalar_select %p38, %s39, %s40
      %p44 = pneg %p38
      %p45 = scmp.eq.s32.totalorder %s15, 1
      %p46 = por %p44, %p45
      %p47 = scmp.ne.s32.totalorder %s39, %s42
      %p48 = scmp.eq.s32.totalorder %s15, 0
      %p49 = por %p47, %p48
      %p50 = scmp.ne.s32.totalorder %s39, %s42
      %p51 = scmp.eq.s32.totalorder %s20, 1
      %p52 = por %p50, %p51
      %p53 = scmp.ne.s32.totalorder %s42, %s43
      %p54 = scmp.eq.s32.totalorder %s20, 0
      %p55 = por %p53, %p54
      %p56 = scmp.ne.s32.totalorder %s42, %s43
      %p57 = scmp.eq.s32.totalorder %s21, 1
      %p58 = por %p56, %p57
      %p60 = scmp.ne.s32.totalorder %s43, %s59
      %p61 = scmp.eq.s32.totalorder %s21, 0
      %p62 = por %p60, %p61
      %s64 = sadd.s32 %s63, 1
      %p67 = scmp.eq.s32.totalorder %s15, 1
      %p68 = scmp.ne.s32.totalorder %s63, %s65
      %p69 = scmp.eq.s32.totalorder %s15, 0
      %p70 = por %p68, %p69
      %p71 = scmp.ne.s32.totalorder %s63, %s65
      %p72 = scmp.eq.s32.totalorder %s20, 1
      %p73 = por %p71, %p72
      %p74 = scmp.ne.s32.totalorder %s65, %s66
      %p75 = scmp.eq.s32.totalorder %s20, 0
      %p76 = por %p74, %p75
      %p77 = scmp.ne.s32.totalorder %s65, %s66
      %p78 = scmp.eq.s32.totalorder %s21, 1
      %p79 = por %p77, %p78
      %p81 = scmp.ne.s32.totalorder %s66, %s80
      %p82 = scmp.eq.s32.totalorder %s21, 0
      %p83 = por %p81, %p82
      %s85 = sadd.s32 %s84, 1
      %p88 = scmp.eq.s32.totalorder %s15, 1
      %p89 = scmp.ne.s32.totalorder %s84, %s86
      %p90 = scmp.eq.s32.totalorder %s15, 0
      %p91 = por %p89, %p90
      %p92 = scmp.ne.s32.totalorder %s84, %s86
      %p93 = scmp.eq.s32.totalorder %s20, 1
      %p94 = por %p92, %p93
      %p95 = scmp.ne.s32.totalorder %s86, %s87
      %p96 = scmp.eq.s32.totalorder %s20, 0
      %p97 = por %p95, %p96
      %p98 = scmp.ne.s32.totalorder %s86, %s87
      %p99 = scmp.eq.s32.totalorder %s21, 1
      %p100 = por %p98, %p99
      %p102 = scmp.ne.s32.totalorder %s87, %s101
      %p103 = scmp.eq.s32.totalorder %s21, 0
      %p104 = por %p102, %p103
      %s106 = sadd.s32 %s105, 1
      %p109 = scmp.eq.s32.totalorder %s15, 1
      %p110 = scmp.ne.s32.totalorder %s105, %s107
      %p111 = scmp.eq.s32.totalorder %s15, 0
      %p112 = por %p110, %p111
      %p113 = scmp.ne.s32.totalorder %s105, %s107
      %p114 = scmp.eq.s32.totalorder %s20, 1
      %p115 = por %p113, %p114
      %p116 = scmp.ne.s32.totalorder %s107, %s108
      %p117 = scmp.eq.s32.totalorder %s20, 0
      %p118 = por %p116, %p117
      %p119 = scmp.ne.s32.totalorder %s107, %s108
      %p120 = scmp.eq.s32.totalorder %s21, 1
      %p121 = por %p119, %p120
      %p123 = scmp.ne.s32.totalorder %s108, %s122
      %p124 = scmp.eq.s32.totalorder %s21, 0
      %p125 = por %p123, %p124
      %s126 = ssub.s32 %s22, %s34
      %p127 = scmp.eq.s32.totalorder %s126, 0
      %s129 = sadd.s32 %s128, 1
      %s130 = scalar_select %p127, %s128, %s129
      %p133 = pneg %p127
      %p134 = scmp.eq.s32.totalorder %s15, 1
      %p135 = por %p133, %p134
      %p136 = scmp.ne.s32.totalorder %s128, %s131
      %p137 = scmp.eq.s32.totalorder %s15, 0
      %p138 = por %p136, %p137
      %p139 = scmp.ne.s32.totalorder %s128, %s131
      %p140 = scmp.eq.s32.totalorder %s20, 1
      %p141 = por %p139, %p140
      %p142 = scmp.ne.s32.totalorder %s131, %s132
      %p143 = scmp.eq.s32.totalorder %s20, 0
      %p144 = por %p142, %p143
      %p145 = scmp.ne.s32.totalorder %s131, %s132
      %p146 = scmp.eq.s32.totalorder %s21, 1
      %p147 = por %p145, %p146
      %p149 = scmp.ne.s32.totalorder %s132, %s148
      %p150 = scmp.eq.s32.totalorder %s21, 0
      %p151 = por %p149, %p150
      %p152 = scmp.le.s32.totalorder 1, %s15
      %p153 = scmp.lt.s32.totalorder %s15, 3
      %p154 = pnand %p152, %p153
      %p155 = pneg %p154
      // Predicated region
      $region9: #{tpu_custom_call.1} parent=5 // pred_check
        _
      $region10: #{tpu_custom_call.1} parent=5 // pred_check_branch
        %157 = sbr.rel (%p154) target = $region12
      $region11: #{tpu_custom_call.1} parent=5 // pred_region
        %s158 = ssub.s32 %s15, 1
        // Predicated region
        $region13: #{tpu_custom_call.1} parent=11 // pred_check
          %p159 = pneg %p76
        $region14: #{tpu_custom_call.1} parent=11 // pred_check_branch
          %161 = sbr.rel (%p159) target = $region16
        $region15: #{tpu_custom_call.1} parent=11 // pred_region
          %s163 = ssub.s32 2048, 2048
          %164 = vsyncadd [#allocation7], %s163
          %s165 = sshll.u32 [#allocation6], 4
          %s166 = int_to_ptr.vmem [resolvable:$true] %s165
          %171 = dma.hbm_to_vmem [thread:$0]  %s1, 2048, %s166, [#allocation7], 128, 128, 8
        $region16: #{tpu_custom_call.1} parent=11 // pred_fallthru
          _
        // Predicated region
        $region17: #{tpu_custom_call.1} parent=11 // pred_check
          %p172 = pneg %p97
        $region18: #{tpu_custom_call.1} parent=11 // pred_check_branch
          %174 = sbr.rel (%p172) target = $region20
        $region19: #{tpu_custom_call.1} parent=11 // pred_region
          %s176 = ssub.s32 2048, 2048
          %177 = vsyncadd [#allocation7], %s176
          %s178 = sshll.u32 [#allocation8], 4
          %s179 = int_to_ptr.vmem [resolvable:$true] %s178
          %184 = dma.hbm_to_vmem [thread:$0]  %s2, 2048, %s179, [#allocation7], 128, 128, 8
        $region20: #{tpu_custom_call.1} parent=11 // pred_fallthru
          _
        // Predicated region
        $region21: #{tpu_custom_call.1} parent=11 // pred_check
          %p185 = pneg %p118
        $region22: #{tpu_custom_call.1} parent=11 // pred_check_branch
          %187 = sbr.rel (%p185) target = $region24
        $region23: #{tpu_custom_call.1} parent=11 // pred_region
          _
        $region24: #{tpu_custom_call.1} parent=11 // pred_fallthru
          _
      $region12: #{tpu_custom_call.1} parent=5 // pred_fallthru
        _
      %p188 = scmp.lt.s32.totalorder %s15, 2
      // Predicated region
      $region25: #{tpu_custom_call.1} parent=5 // pred_check
        %p189 = pneg %p188
      $region26: #{tpu_custom_call.1} parent=5 // pred_check_branch
        %191 = sbr.rel (%p189) target = $region28
      $region27: #{tpu_custom_call.1} parent=5 // pred_region
        // Predicated region
        $region29: #{tpu_custom_call.1} parent=27 // pred_check
          %p192 = pneg %p49
        $region30: #{tpu_custom_call.1} parent=27 // pred_check_branch
          %194 = sbr.rel (%p192) target = $region32
        $region31: #{tpu_custom_call.1} parent=27 // pred_region
          %s195 = sand.u32 %s39, 1
          %s196 = scalar_lea.sflag [#allocation4], %s195
          %s197 = sand.u32 %s39, 1
          %s198 = smul.addr %s197, 32
          %s199 = scalar_lea.vmem [#allocation3], %s198
          %s200 = smul.u32 4, %s23
          %s202 = ssub.s32 512, 512
          %203 = vsyncadd %s196, %s202
          %s204 = sadd.s32 %s22, %s200
          %s205 = smul.addr %s204, 128
          %s206 = scalar_lea.hbm %s0, %s205
          %s207 = sshll.u32 %s199, 4
          %s208 = int_to_ptr.vmem [resolvable:$true] %s207
          %213 = dma.hbm_to_vmem [thread:$0]  %s206, 512, %s208, %s196, 128, 128, 8
        $region32: #{tpu_custom_call.1} parent=27 // pred_fallthru
          _
      $region28: #{tpu_custom_call.1} parent=5 // pred_fallthru
        _
      %p214 = scmp.le.s32.totalorder 1, %s15
      %p215 = scmp.lt.s32.totalorder %s15, 3
      %p216 = pnand %p214, %p215
      %p217 = pneg %p216
      // Predicated region
      $region33: #{tpu_custom_call.1} parent=5 // pred_check
        _
      $region34: #{tpu_custom_call.1} parent=5 // pred_check_branch
        %219 = sbr.rel (%p216) target = $region36
      $region35: #{tpu_custom_call.1} parent=5 // pred_region
        %s220 = ssub.s32 %s15, 1
        %s221 = sand.u32 %s42, 1
        %s222 = scalar_lea.sflag [#allocation4], %s221
        %s223 = sand.u32 %s42, 1
        %s224 = smul.addr %s223, 32
        %s225 = scalar_lea.vmem [#allocation3], %s224
        // Predicated region
        $region37: #{tpu_custom_call.1} parent=35 // pred_check
          %p226 = pneg %p55
        $region38: #{tpu_custom_call.1} parent=35 // pred_check_branch
          %228 = sbr.rel (%p226) target = $region40
        $region39: #{tpu_custom_call.1} parent=35 // pred_region
          %229 = dma.done %s222, 512
        $region40: #{tpu_custom_call.1} parent=35 // pred_fallthru
          _
        // Predicated region
        $region41: #{tpu_custom_call.1} parent=35 // pred_check
          %p230 = pneg %p76
        $region42: #{tpu_custom_call.1} parent=35 // pred_check_branch
          %232 = sbr.rel (%p230) target = $region44
        $region43: #{tpu_custom_call.1} parent=35 // pred_region
          %233 = dma.done [#allocation7], 2048
        $region44: #{tpu_custom_call.1} parent=35 // pred_fallthru
          _
        // Predicated region
        $region45: #{tpu_custom_call.1} parent=35 // pred_check
          %p234 = pneg %p97
        $region46: #{tpu_custom_call.1} parent=35 // pred_check_branch
          %236 = sbr.rel (%p234) target = $region48
        $region47: #{tpu_custom_call.1} parent=35 // pred_region
          %237 = dma.done [#allocation7], 2048
        $region48: #{tpu_custom_call.1} parent=35 // pred_fallthru
          _
        %s238 = sand.u32 %s42, 1
        %s239 = scalar_lea.sflag [#allocation4], %s238
        %s240 = sand.u32 %s42, 1
        %s241 = smul.addr %s240, 32
        %s242 = scalar_lea.vmem [#allocation3], %s241
        %p243 = pneg %p55
        %p244 = pneg %p52
        %p245 = pneg %p76
        %p246 = pneg %p73
        %p247 = pneg %p97
        %p248 = pneg %p94
        %p249 = pneg %p118
        %p250 = pneg %p115
        %p251 = pneg %p144
        %p252 = pneg %p141
        %s253 = smul.u32 4, %s25
        %p254 = scmp.eq.s32.totalorder %s25, 0
        // Predicated region
        $region49: #{tpu_custom_call.1} parent=35 // pred_check
          %p255 = pneg %p254
        $region50: #{tpu_custom_call.1} parent=35 // pred_check_branch
          %257 = sbr.rel (%p255) target = $region52
        $region51: #{tpu_custom_call.1} parent=35 // pred_region
          %258 = vst [vmem:[#allocation2] sm:$0xff] 0.0
        $region52: #{tpu_custom_call.1} parent=35 // pred_fallthru
          _
        %v259 = vld [vmem:[#allocation6] sm:$0xff]
        %v260 = vld [vmem:[#allocation6 + $0x8] sm:$0xff]
        %v261 = vld [vmem:[#allocation6 + $0x10] sm:$0xff]
        %v262 = vld [vmem:[#allocation6 + $0x18] sm:$0xff]
        %v263 = vld [vmem:[#allocation6 + $0x20] sm:$0xff]
        %v264 = vld [vmem:[#allocation6 + $0x28] sm:$0xff]
        %v265 = vld [vmem:[#allocation6 + $0x30] sm:$0xff]
        %v266 = vld [vmem:[#allocation6 + $0x38] sm:$0xff]
        %v267 = vld [vmem:[#allocation6 + $0x40] sm:$0xff]
        %v268 = vld [vmem:[#allocation6 + $0x48] sm:$0xff]
        %v269 = vld [vmem:[#allocation6 + $0x50] sm:$0xff]
        %v270 = vld [vmem:[#allocation6 + $0x58] sm:$0xff]
        %v271 = vld [vmem:[#allocation6 + $0x60] sm:$0xff]
        %v272 = vld [vmem:[#allocation6 + $0x68] sm:$0xff]
        %v273 = vld [vmem:[#allocation6 + $0x70] sm:$0xff]
        %v274 = vld [vmem:[#allocation6 + $0x78] sm:$0xff]
        %v275 = vld [vmem:[#allocation2] sm:$0xff]
        %v276 = vld [vmem:[%s225] sm:$0xff]
        %277 = vmatprep.subr.mxu0 0.0
        %278 = vmatpush1.msra.mxu0 %v274
        %279 = vmatprep.subr.mxu0 0.0
        %280 = vmatpush1.msra.mxu0 %v273
        %281 = vmatprep.subr.mxu0 0.0
        %282 = vmatpush1.msra.mxu0 %v272
        %283 = vmatprep.subr.mxu0 0.0
        %284 = vmatpush1.msra.mxu0 %v271
        %285 = vmatprep.subr.mxu0 0.0
        %286 = vmatpush1.msra.mxu0 %v270
        %287 = vmatprep.subr.mxu0 0.0
        %288 = vmatpush1.msra.mxu0 %v269
        %289 = vmatprep.subr.mxu0 0.0
        %290 = vmatpush1.msra.mxu0 %v268
        %291 = vmatprep.subr.mxu0 0.0
        %292 = vmatpush1.msra.mxu0 %v267
        %293 = vmatprep.subr.mxu0 0.0
        %294 = vmatpush1.msra.mxu0 %v266
        %295 = vmatprep.subr.mxu0 0.0
        %296 = vmatpush1.msra.mxu0 %v265
        %297 = vmatprep.subr.mxu0 0.0
        %298 = vmatpush1.msra.mxu0 %v264
        %299 = vmatprep.subr.mxu0 0.0
        %300 = vmatpush1.msra.mxu0 %v263
        %301 = vmatprep.subr.mxu0 0.0
        %302 = vmatpush1.msra.mxu0 %v262
        %303 = vmatprep.subr.mxu0 0.0
        %304 = vmatpush1.msra.mxu0 %v261
        %305 = vmatprep.subr.mxu0 0.0
        %306 = vmatpush1.msra.mxu0 %v260
        %307 = vmatprep.subr.mxu0 0.0
        %308 = vmatpush1.msra.mxu0 %v259
        %309 = vmatprep.subr.mxu0 0.0
        %310 = vmatpush2.msra.mxu0 0.0
        %311 = vmatprep.subr.mxu0 0.0
        %312 = vmatpush2.msra.mxu0 0.0
        %313 = vmatprep.subr.mxu0 0.0
        %314 = vmatpush2.msra.mxu0 0.0
        %315 = vmatprep.subr.mxu0 0.0
        %316 = vmatpush2.msra.mxu0 0.0
        %317 = vmatprep.subr.mxu0 0.0
        %318 = vmatpush2.msra.mxu0 0.0
        %319 = vmatprep.subr.mxu0 0.0
        %320 = vmatpush2.msra.mxu0 0.0
        %321 = vmatprep.subr.mxu0 0.0
        %322 = vmatpush2.msra.mxu0 0.0
        %323 = vmatprep.subr.mxu0 0.0
        %324 = vmatpush2.msra.mxu0 0.0
        %325 = vmatprep.subr.mxu0 0.0
        %326 = vmatpush2.msra.mxu0 0.0
        %327 = vmatprep.subr.mxu0 0.0
        %328 = vmatpush2.msra.mxu0 0.0
        %329 = vmatprep.subr.mxu0 0.0
        %330 = vmatpush2.msra.mxu0 0.0
        %331 = vmatprep.subr.mxu0 0.0
        %332 = vmatpush2.msra.mxu0 0.0
        %333 = vmatprep.subr.mxu0 0.0
        %334 = vmatpush2.msra.mxu0 0.0
        %335 = vmatprep.subr.mxu0 0.0
        %336 = vmatpush2.msra.mxu0 0.0
        %337 = vmatprep.subr.mxu0 0.0
        %338 = vmatpush2.msra.mxu0 0.0
        %339 = vmatprep.subr.mxu0 0.0
        %340 = vmatpush2.msra.mxu0 0.0
        %341 = vmatprep.mubr.f32.mxu0 0.0
        %342 = vmatmul.mubr.f32.gmra.mxu0 %v275
        %v343 = vpop.f32.mrf.mxu0
        %v344 = vadd.f32 0.0, %v343
        %v345 = vpop.f32.mrf.mxu0
        %346 = vdwg.mxu0
        %v347 = vadd.f32 %v276, %v344
        %v348 = vtanh.pop %v347
        %s349 = scalar_lea.vmem %s225, 8 [#allocation3]
        %v350 = vld [vmem:[%s349] sm:$0xff]
        %351 = vmatprep.subr.mxu0 0.0
        %352 = vmatpush1.msra.mxu0 %v274
        %353 = vmatprep.subr.mxu0 0.0
        %354 = vmatpush1.msra.mxu0 %v273
        %355 = vmatprep.subr.mxu0 0.0
        %356 = vmatpush1.msra.mxu0 %v272
        %357 = vmatprep.subr.mxu0 0.0
        %358 = vmatpush1.msra.mxu0 %v271
        %359 = vmatprep.subr.mxu0 0.0
        %360 = vmatpush1.msra.mxu0 %v270
        %361 = vmatprep.subr.mxu0 0.0
        %362 = vmatpush1.msra.mxu0 %v269
        %363 = vmatprep.subr.mxu0 0.0
        %364 = vmatpush1.msra.mxu0 %v268
        %365 = vmatprep.subr.mxu0 0.0
        %366 = vmatpush1.msra.mxu0 %v267
        %367 = vmatprep.subr.mxu0 0.0
        %368 = vmatpush1.msra.mxu0 %v266
        %369 = vmatprep.subr.mxu0 0.0
        %370 = vmatpush1.msra.mxu0 %v265
        %371 = vmatprep.subr.mxu0 0.0
        %372 = vmatpush1.msra.mxu0 %v264
        %373 = vmatprep.subr.mxu0 0.0
        %374 = vmatpush1.msra.mxu0 %v263
        %375 = vmatprep.subr.mxu0 0.0
        %376 = vmatpush1.msra.mxu0 %v262
        %377 = vmatprep.subr.mxu0 0.0
        %378 = vmatpush1.msra.mxu0 %v261
        %379 = vmatprep.subr.mxu0 0.0
        %380 = vmatpush1.msra.mxu0 %v260
        %381 = vmatprep.subr.mxu0 0.0
        %382 = vmatpush1.msra.mxu0 %v259
        %383 = vmatprep.subr.mxu0 0.0
        %384 = vmatpush2.msra.mxu0 0.0
        %385 = vmatprep.subr.mxu0 0.0
        %386 = vmatpush2.msra.mxu0 0.0
        %387 = vmatprep.subr.mxu0 0.0
        %388 = vmatpush2.msra.mxu0 0.0
        %389 = vmatprep.subr.mxu0 0.0
        %390 = vmatpush2.msra.mxu0 0.0
        %391 = vmatprep.subr.mxu0 0.0
        %392 = vmatpush2.msra.mxu0 0.0
        %393 = vmatprep.subr.mxu0 0.0
        %394 = vmatpush2.msra.mxu0 0.0
        %395 = vmatprep.subr.mxu0 0.0
        %396 = vmatpush2.msra.mxu0 0.0
        %397 = vmatprep.subr.mxu0 0.0
        %398 = vmatpush2.msra.mxu0 0.0
        %399 = vmatprep.subr.mxu0 0.0
        %400 = vmatpush2.msra.mxu0 0.0
        %401 = vmatprep.subr.mxu0 0.0
        %402 = vmatpush2.msra.mxu0 0.0
        %403 = vmatprep.subr.mxu0 0.0
        %404 = vmatpush2.msra.mxu0 0.0
        %405 = vmatprep.subr.mxu0 0.0
        %406 = vmatpush2.msra.mxu0 0.0
        %407 = vmatprep.subr.mxu0 0.0
        %408 = vmatpush2.msra.mxu0 0.0
        %409 = vmatprep.subr.mxu0 0.0
        %410 = vmatpush2.msra.mxu0 0.0
        %411 = vmatprep.subr.mxu0 0.0
        %412 = vmatpush2.msra.mxu0 0.0
        %413 = vmatprep.subr.mxu0 0.0
        %414 = vmatpush2.msra.mxu0 0.0
        %415 = vmatprep.mubr.f32.mxu0 0.0
        %416 = vmatmul.mubr.f32.gmra.mxu0 %v348
        %v417 = vpop.f32.mrf.mxu0
        %v418 = vadd.f32 0.0, %v417
        %v419 = vpop.f32.mrf.mxu0
        %420 = vdwg.mxu0
        %v421 = vadd.f32 %v350, %v418
        %v422 = vtanh.pop %v421
        %s423 = scalar_lea.vmem %s225, 16 [#allocation3]
        %v424 = vld [vmem:[%s423] sm:$0xff]
        %425 = vmatprep.subr.mxu0 0.0
        %426 = vmatpush1.msra.mxu0 %v274
        %427 = vmatprep.subr.mxu0 0.0
        %428 = vmatpush1.msra.mxu0 %v273
        %429 = vmatprep.subr.mxu0 0.0
        %430 = vmatpush1.msra.mxu0 %v272
        %431 = vmatprep.subr.mxu0 0.0
        %432 = vmatpush1.msra.mxu0 %v271
        %433 = vmatprep.subr.mxu0 0.0
        %434 = vmatpush1.msra.mxu0 %v270
        %435 = vmatprep.subr.mxu0 0.0
        %436 = vmatpush1.msra.mxu0 %v269
        %437 = vmatprep.subr.mxu0 0.0
        %438 = vmatpush1.msra.mxu0 %v268
        %439 = vmatprep.subr.mxu0 0.0
        %440 = vmatpush1.msra.mxu0 %v267
        %441 = vmatprep.subr.mxu0 0.0
        %442 = vmatpush1.msra.mxu0 %v266
        %443 = vmatprep.subr.mxu0 0.0
        %444 = vmatpush1.msra.mxu0 %v265
        %445 = vmatprep.subr.mxu0 0.0
        %446 = vmatpush1.msra.mxu0 %v264
        %447 = vmatprep.subr.mxu0 0.0
        %448 = vmatpush1.msra.mxu0 %v263
        %449 = vmatprep.subr.mxu0 0.0
        %450 = vmatpush1.msra.mxu0 %v262
        %451 = vmatprep.subr.mxu0 0.0
        %452 = vmatpush1.msra.mxu0 %v261
        %453 = vmatprep.subr.mxu0 0.0
        %454 = vmatpush1.msra.mxu0 %v260
        %455 = vmatprep.subr.mxu0 0.0
        %456 = vmatpush1.msra.mxu0 %v259
        %457 = vmatprep.subr.mxu0 0.0
        %458 = vmatpush2.msra.mxu0 0.0
        %459 = vmatprep.subr.mxu0 0.0
        %460 = vmatpush2.msra.mxu0 0.0
        %461 = vmatprep.subr.mxu0 0.0
        %462 = vmatpush2.msra.mxu0 0.0
        %463 = vmatprep.subr.mxu0 0.0
        %464 = vmatpush2.msra.mxu0 0.0
        %465 = vmatprep.subr.mxu0 0.0
        %466 = vmatpush2.msra.mxu0 0.0
        %467 = vmatprep.subr.mxu0 0.0
        %468 = vmatpush2.msra.mxu0 0.0
        %469 = vmatprep.subr.mxu0 0.0
        %470 = vmatpush2.msra.mxu0 0.0
        %471 = vmatprep.subr.mxu0 0.0
        %472 = vmatpush2.msra.mxu0 0.0
        %473 = vmatprep.subr.mxu0 0.0
        %474 = vmatpush2.msra.mxu0 0.0
        %475 = vmatprep.subr.mxu0 0.0
        %476 = vmatpush2.msra.mxu0 0.0
        %477 = vmatprep.subr.mxu0 0.0
        %478 = vmatpush2.msra.mxu0 0.0
        %479 = vmatprep.subr.mxu0 0.0
        %480 = vmatpush2.msra.mxu0 0.0
        %481 = vmatprep.subr.mxu0 0.0
        %482 = vmatpush2.msra.mxu0 0.0
        %483 = vmatprep.subr.mxu0 0.0
        %484 = vmatpush2.msra.mxu0 0.0
        %485 = vmatprep.subr.mxu0 0.0
        %486 = vmatpush2.msra.mxu0 0.0
        %487 = vmatprep.subr.mxu0 0.0
        %488 = vmatpush2.msra.mxu0 0.0
        %489 = vmatprep.mubr.f32.mxu0 0.0
        %490 = vmatmul.mubr.f32.gmra.mxu0 %v422
        %v491 = vpop.f32.mrf.mxu0
        %v492 = vadd.f32 0.0, %v491
        %v493 = vpop.f32.mrf.mxu0
        %494 = vdwg.mxu0
        %v495 = vadd.f32 %v424, %v492
        %v496 = vtanh.pop %v495
        %s497 = scalar_lea.vmem %s225, 24 [#allocation3]
        %v498 = vld [vmem:[%s497] sm:$0xff]
        %499 = vmatprep.subr.mxu0 0.0
        %500 = vmatpush1.msra.mxu0 %v274
        %501 = vmatprep.subr.mxu0 0.0
        %502 = vmatpush1.msra.mxu0 %v273
        %503 = vmatprep.subr.mxu0 0.0
        %504 = vmatpush1.msra.mxu0 %v272
        %505 = vmatprep.subr.mxu0 0.0
        %506 = vmatpush1.msra.mxu0 %v271
        %507 = vmatprep.subr.mxu0 0.0
        %508 = vmatpush1.msra.mxu0 %v270
        %509 = vmatprep.subr.mxu0 0.0
        %510 = vmatpush1.msra.mxu0 %v269
        %511 = vmatprep.subr.mxu0 0.0
        %512 = vmatpush1.msra.mxu0 %v268
        %513 = vmatprep.subr.mxu0 0.0
        %514 = vmatpush1.msra.mxu0 %v267
        %515 = vmatprep.subr.mxu0 0.0
        %516 = vmatpush1.msra.mxu0 %v266
        %517 = vmatprep.subr.mxu0 0.0
        %518 = vmatpush1.msra.mxu0 %v265
        %519 = vmatprep.subr.mxu0 0.0
        %520 = vmatpush1.msra.mxu0 %v264
        %521 = vmatprep.subr.mxu0 0.0
        %522 = vmatpush1.msra.mxu0 %v263
        %523 = vmatprep.subr.mxu0 0.0
        %524 = vmatpush1.msra.mxu0 %v262
        %525 = vmatprep.subr.mxu0 0.0
        %526 = vmatpush1.msra.mxu0 %v261
        %527 = vmatprep.subr.mxu0 0.0
        %528 = vmatpush1.msra.mxu0 %v260
        %529 = vmatprep.subr.mxu0 0.0
        %530 = vmatpush1.msra.mxu0 %v259
        %531 = vmatprep.subr.mxu0 0.0
        %532 = vmatpush2.msra.mxu0 0.0
        %533 = vmatprep.subr.mxu0 0.0
        %534 = vmatpush2.msra.mxu0 0.0
        %535 = vmatprep.subr.mxu0 0.0
        %536 = vmatpush2.msra.mxu0 0.0
        %537 = vmatprep.subr.mxu0 0.0
        %538 = vmatpush2.msra.mxu0 0.0
        %539 = vmatprep.subr.mxu0 0.0
        %540 = vmatpush2.msra.mxu0 0.0
        %541 = vmatprep.subr.mxu0 0.0
        %542 = vmatpush2.msra.mxu0 0.0
        %543 = vmatprep.subr.mxu0 0.0
        %544 = vmatpush2.msra.mxu0 0.0
        %545 = vmatprep.subr.mxu0 0.0
        %546 = vmatpush2.msra.mxu0 0.0
        %547 = vmatprep.subr.mxu0 0.0
        %548 = vmatpush2.msra.mxu0 0.0
        %549 = vmatprep.subr.mxu0 0.0
        %550 = vmatpush2.msra.mxu0 0.0
        %551 = vmatprep.subr.mxu0 0.0
        %552 = vmatpush2.msra.mxu0 0.0
        %553 = vmatprep.subr.mxu0 0.0
        %554 = vmatpush2.msra.mxu0 0.0
        %555 = vmatprep.subr.mxu0 0.0
        %556 = vmatpush2.msra.mxu0 0.0
        %557 = vmatprep.subr.mxu0 0.0
        %558 = vmatpush2.msra.mxu0 0.0
        %559 = vmatprep.subr.mxu0 0.0
        %560 = vmatpush2.msra.mxu0 0.0
        %561 = vmatprep.subr.mxu0 0.0
        %562 = vmatpush2.msra.mxu0 0.0
        %563 = vmatprep.mubr.f32.mxu0 0.0
        %564 = vmatmul.mubr.f32.gmra.mxu0 %v496
        %v565 = vpop.f32.mrf.mxu0
        %v566 = vadd.f32 0.0, %v565
        %v567 = vpop.f32.mrf.mxu0
        %568 = vdwg.mxu0
        %v569 = vadd.f32 %v498, %v566
        %v570 = vtanh.pop %v569
        %571 = vst [vmem:[#allocation2] sm:$0xff] %v570
        %p572 = scmp.eq.s32.totalorder %s25, 1
        // Predicated region
        $region53: #{tpu_custom_call.1} parent=35 // pred_check
          %p573 = pneg %p572
        $region54: #{tpu_custom_call.1} parent=35 // pred_check_branch
          %575 = sbr.rel (%p573) target = $region56
        $region55: #{tpu_custom_call.1} parent=35 // pred_region
          %v576 = vld [vmem:[#allocation8] sm:$0xff]
          %v577 = vld [vmem:[#allocation8 + $0x8] sm:$0xff]
          %v578 = vld [vmem:[#allocation8 + $0x10] sm:$0xff]
          %v579 = vld [vmem:[#allocation8 + $0x18] sm:$0xff]
          %v580 = vld [vmem:[#allocation8 + $0x20] sm:$0xff]
          %v581 = vld [vmem:[#allocation8 + $0x28] sm:$0xff]
          %v582 = vld [vmem:[#allocation8 + $0x30] sm:$0xff]
          %v583 = vld [vmem:[#allocation8 + $0x38] sm:$0xff]
          %v584 = vld [vmem:[#allocation8 + $0x40] sm:$0xff]
          %v585 = vld [vmem:[#allocation8 + $0x48] sm:$0xff]
          %v586 = vld [vmem:[#allocation8 + $0x50] sm:$0xff]
          %v587 = vld [vmem:[#allocation8 + $0x58] sm:$0xff]
          %v588 = vld [vmem:[#allocation8 + $0x60] sm:$0xff]
          %v589 = vld [vmem:[#allocation8 + $0x68] sm:$0xff]
          %v590 = vld [vmem:[#allocation8 + $0x70] sm:$0xff]
          %v591 = vld [vmem:[#allocation8 + $0x78] sm:$0xff]
          %v592 = vld [vmem:[%s3] sm:$0x1]
          %v594 = vlaneseq
          %v595 = vshrl.u32 %v594, 7
          %v596 = vsub.s32 0, %v595
          %v597 = vrot.slane %v592, %v596
          %599 = vmatprep.subr.mxu0 0.0
          %600 = vmatpush1.msra.mxu0 %v591
          %601 = vmatprep.subr.mxu0 0.0
          %602 = vmatpush1.msra.mxu0 %v590
          %603 = vmatprep.subr.mxu0 0.0
          %604 = vmatpush1.msra.mxu0 %v589
          %605 = vmatprep.subr.mxu0 0.0
          %606 = vmatpush1.msra.mxu0 %v588
          %607 = vmatprep.subr.mxu0 0.0
          %608 = vmatpush1.msra.mxu0 %v587
          %609 = vmatprep.subr.mxu0 0.0
          %610 = vmatpush1.msra.mxu0 %v586
          %611 = vmatprep.subr.mxu0 0.0
          %612 = vmatpush1.msra.mxu0 %v585
          %613 = vmatprep.subr.mxu0 0.0
          %614 = vmatpush1.msra.mxu0 %v584
          %615 = vmatprep.subr.mxu0 0.0
          %616 = vmatpush1.msra.mxu0 %v583
          %617 = vmatprep.subr.mxu0 0.0
          %618 = vmatpush1.msra.mxu0 %v582
          %619 = vmatprep.subr.mxu0 0.0
          %620 = vmatpush1.msra.mxu0 %v581
          %621 = vmatprep.subr.mxu0 0.0
          %622 = vmatpush1.msra.mxu0 %v580
          %623 = vmatprep.subr.mxu0 0.0
          %624 = vmatpush1.msra.mxu0 %v579
          %625 = vmatprep.subr.mxu0 0.0
          %626 = vmatpush1.msra.mxu0 %v578
          %627 = vmatprep.subr.mxu0 0.0
          %628 = vmatpush1.msra.mxu0 %v577
          %629 = vmatprep.subr.mxu0 0.0
          %630 = vmatpush1.msra.mxu0 %v576
          %631 = vmatprep.subr.mxu0 0.0
          %632 = vmatpush2.msra.mxu0 0.0
          %633 = vmatprep.subr.mxu0 0.0
          %634 = vmatpush2.msra.mxu0 0.0
          %635 = vmatprep.subr.mxu0 0.0
          %636 = vmatpush2.msra.mxu0 0.0
          %637 = vmatprep.subr.mxu0 0.0
          %638 = vmatpush2.msra.mxu0 0.0
          %639 = vmatprep.subr.mxu0 0.0
          %640 = vmatpush2.msra.mxu0 0.0
          %641 = vmatprep.subr.mxu0 0.0
          %642 = vmatpush2.msra.mxu0 0.0
          %643 = vmatprep.subr.mxu0 0.0
          %644 = vmatpush2.msra.mxu0 0.0
          %645 = vmatprep.subr.mxu0 0.0
          %646 = vmatpush2.msra.mxu0 0.0
          %647 = vmatprep.subr.mxu0 0.0
          %648 = vmatpush2.msra.mxu0 0.0
          %649 = vmatprep.subr.mxu0 0.0
          %650 = vmatpush2.msra.mxu0 0.0
          %651 = vmatprep.subr.mxu0 0.0
          %652 = vmatpush2.msra.mxu0 0.0
          %653 = vmatprep.subr.mxu0 0.0
          %654 = vmatpush2.msra.mxu0 0.0
          %655 = vmatprep.subr.mxu0 0.0
          %656 = vmatpush2.msra.mxu0 0.0
          %657 = vmatprep.subr.mxu0 0.0
          %658 = vmatpush2.msra.mxu0 0.0
          %659 = vmatprep.subr.mxu0 0.0
          %660 = vmatpush2.msra.mxu0 0.0
          %661 = vmatprep.subr.mxu0 0.0
          %662 = vmatpush2.msra.mxu0 0.0
          %663 = vmatprep.mubr.f32.mxu0 0.0
          %664 = vmatmul.mubr.f32.gmra.mxu0 %v570
          %v665 = vpop.f32.mrf.mxu0
          %v666 = vadd.f32 %v597, %v665
          %v667 = vpop.f32.mrf.mxu0
          %668 = vdwg.mxu0
          %669 = vst [vmem:[#allocation9] sm:$0xff] %v666
        $region56: #{tpu_custom_call.1} parent=35 // pred_fallthru
          _
        // Predicated region
        $region57: #{tpu_custom_call.1} parent=35 // pred_check
          %p670 = pneg %p141
        $region58: #{tpu_custom_call.1} parent=35 // pred_check_branch
          %672 = sbr.rel (%p670) target = $region60
        $region59: #{tpu_custom_call.1} parent=35 // pred_region
          %s674 = ssub.s32 128, 128
          %675 = vsyncadd [#allocation5], %s674
          %s676 = smul.addr %s24, 128
          %s677 = scalar_lea.hbm %s4, %s676
          %s679 = sshll.u32 [#allocation9], 4
          %s680 = int_to_ptr.vmem [resolvable:$true] %s679
          %682 = dma.vmem_to_hbm [thread:$0]  %s680, 128, %s677, [#allocation5]
        $region60: #{tpu_custom_call.1} parent=35 // pred_fallthru
          _
        // Predicated region
        $region61: #{tpu_custom_call.1} parent=35 // pred_check
          %p683 = pneg %p141
        $region62: #{tpu_custom_call.1} parent=35 // pred_check_branch
          %685 = sbr.rel (%p683) target = $region64
        $region63: #{tpu_custom_call.1} parent=35 // pred_region
          %686 = dma.done [#allocation5], 128
        $region64: #{tpu_custom_call.1} parent=35 // pred_fallthru
          _
      $region36: #{tpu_custom_call.1} parent=5 // pred_fallthru
        _
      %p687 = scmp.le.s32.totalorder 2, %s15
      // Predicated region
      $region65: #{tpu_custom_call.1} parent=5 // pred_check
        %p688 = pneg %p687
      $region66: #{tpu_custom_call.1} parent=5 // pred_check_branch
        %690 = sbr.rel (%p688) target = $region68
      $region67: #{tpu_custom_call.1} parent=5 // pred_region
        %s691 = ssub.s32 %s15, 2
      $region68: #{tpu_custom_call.1} parent=5 // pred_fallthru
        _
    $region6: #{tpu_custom_call.1} parent=1 // loop_footer
      %s19 = sadd.s32 1, %s15
    $region7: #{tpu_custom_call.1} parent=1 // loop_footer_branch
      %14 = sbr.rel target = $region3
    $region8: #{tpu_custom_call.1} parent=1 // loop_exit
      _
    %692 = vsyncpa [#allocation4], 1
    %s693 = scalar_lea.sflag [#allocation4], 1
    %694 = vsyncpa %s693, 1
    %695 = vsyncpa [#allocation7], 1
    %696 = vsyncpa [#allocation5], 1
    %s697 = scalar_lea.sflag [#allocation5], 1
    %698 = vsyncpa %s697, 1

</llo_original>
